<compile_context>
chip_gen: v6e
topology: v6e:2x2x1
jax: 0.10.0
libtpu: 0.0.40
codegen_flags: <defaults>
</compile_context>

<pallas_src>
import functools

import jax
import jax.numpy as jnp
from jax.experimental import pallas as pl
from jax.experimental.pallas import tpu as pltpu

_BN_EPS = 1e-5
_NEG_INF = -1e30

_VMEM = pl.BlockSpec(memory_space=pltpu.MemorySpace.VMEM)
_SMEM = pl.BlockSpec(memory_space=pltpu.MemorySpace.SMEM)


def _round_up(n, m=128):
    return ((n + m - 1) // m) * m


# ---------------------------------------------------------------------------
# shared in-kernel helper: masked softmax / log-softmax over the first
# `num_valid` lanes (padded lanes contribute exactly zero probability).
# ---------------------------------------------------------------------------
def _masked_logsoftmax(logits, num_valid):
    ncols = logits.shape[-1]
    col = jax.lax.broadcasted_iota(jnp.int32, (1, ncols), 1)
    logits = jnp.where(col < num_valid, logits, jnp.float32(_NEG_INF))
    m = jnp.max(logits, axis=-1, keepdims=True)
    z = logits - m
    ez = jnp.exp(z)
    s = jnp.sum(ez, axis=-1, keepdims=True)
    p = ez * pl.reciprocal(s, approx=True)          # EUP slot, not VALU divide
    logp = z - jnp.log(s)
    return p, logp


# ---------------------------------------------------------------------------
# Kernel 1: projector / classifier head
#   Linear(D,D) -> BatchNorm1d -> ReLU -> [Dropout] -> Linear(D,O_pad)
#   -> BatchNorm1d [-> L2 normalize (projector only)]
#   bf16 MXU inputs, f32 accumulation, f32 elementwise (v5e-safe).
# ---------------------------------------------------------------------------
def _mlp_head_kernel(x_ref, w1_ref, b1_ref, g1_ref, be1_ref,
                     w2_ref, b2_ref, g2_ref, be2_ref, out_ref, *, l2_normalize):
    n = x_ref.shape[0]
    inv_n = 1.0 / n

    x = x_ref[...].astype(jnp.bfloat16)
    h = jnp.dot(x, w1_ref[...], preferred_element_type=jnp.float32) + b1_ref[...]

    # single-pass moments: var = E[h^2] - mu^2 ; hoisted per-feature scale/shift
    mu = jnp.sum(h, axis=0, keepdims=True) * inv_n
    ex2 = jnp.sum(h * h, axis=0, keepdims=True) * inv_n
    var = jnp.maximum(ex2 - mu * mu, 0.0)
    scale1 = g1_ref[...] * jax.lax.rsqrt(var + _BN_EPS)
    shift1 = be1_ref[...] - mu * scale1
    h = jnp.maximum(h * scale1 + shift1, 0.0)
    # TODO(synk): nn.Dropout(p=0.25) in the classifier head is stochastic in
    # train mode; treated as identity here for determinism.

    z = jnp.dot(h.astype(jnp.bfloat16), w2_ref[...],
                preferred_element_type=jnp.float32) + b2_ref[...]
    mu2 = jnp.sum(z, axis=0, keepdims=True) * inv_n
    ex2b = jnp.sum(z * z, axis=0, keepdims=True) * inv_n
    var2 = jnp.maximum(ex2b - mu2 * mu2, 0.0)
    scale2 = g2_ref[...] * jax.lax.rsqrt(var2 + _BN_EPS)
    shift2 = be2_ref[...] - mu2 * scale2
    y = z * scale2 + shift2

    if l2_normalize:
        ss = jnp.sum(y * y, axis=1, keepdims=True)
        y = y * jax.lax.rsqrt(jnp.maximum(ss, 1e-12))

    out_ref[...] = y


def mlp_head(x, params, *, l2_normalize=False):
    w1, b1, g1, be1, w2, b2, g2, be2 = params
    n = x.shape[0]
    out_dim = w2.shape[1]
    return pl.pallas_call(
        functools.partial(_mlp_head_kernel, l2_normalize=l2_normalize),
        out_shape=jax.ShapeDtypeStruct((n, out_dim), jnp.float32),
        in_specs=[_VMEM] * 9,
        out_specs=_VMEM,
    )(x, w1, b1, g1, be1, w2, b2, g2, be2)


# ---------------------------------------------------------------------------
# Kernel 2 (fused): softmax of q_logits1/q_logits2, corrected targets,
#                   cls_loss1, and the (unmixed) mix target.
# ---------------------------------------------------------------------------
def _cls1_targets_kernel(ql1_ref, ql2_ref, onehot_ref, conf_ref,
                         loss_ref, tm_ref, *, num_cluster, scale1, scale2):
    n = ql1_ref.shape[0]
    p1, logp1 = _masked_logsoftmax(ql1_ref[...].astype(jnp.float32), num_cluster)
    p2, logp2 = _masked_logsoftmax(ql2_ref[...].astype(jnp.float32), num_cluster)
    onehot = onehot_ref[...]
    conf = conf_ref[...]                       # [N, 1]

    lam1 = conf * scale1
    tc1 = (1.0 - lam1) * p2 + lam1 * onehot
    tc2 = (1.0 - lam1) * p1 + lam1 * onehot
    loss_ref[0] = -(jnp.sum(tc1 * logp1) + jnp.sum(tc2 * logp2)) * (1.0 / n)

    lam2 = conf * scale2
    tm_ref[...] = (1.0 - lam2) * (0.5 * (p1 + p2)) + lam2 * onehot


# ---------------------------------------------------------------------------
# Kernel 3 (fused): entropy / neg-entropy regularizers on w_logits,
#                   CE(mix_logits, tmc), and the prototype-alignment CE
#                   (q_mix contracted against prototypes on the feature dim,
#                    no host-side transpose).
#   SMEM output: [ent_loss, ne_loss, cls_loss2, align_loss]
# ---------------------------------------------------------------------------
def _reg_mix_align_kernel(wl_ref, ml_ref, qmix_ref, proto_ref, tmc_ref,
                          out_ref, *, num_cluster, inv_t):
    # --- forward_reg_loss on w_logits -------------------------------------
    n_w = wl_ref.shape[0]
    pw, logpw = _masked_logsoftmax(wl_ref[...].astype(jnp.float32), num_cluster)
    out_ref[0] = -jnp.sum(pw * logpw) * (1.0 / n_w)
    pm = jnp.mean(pw, axis=0, keepdims=True)
    out_ref[1] = jnp.sum(pm * jnp.log(jnp.maximum(pm, 1e-12)))

    # --- cls_loss2 = CE(mix_logits, tmc) -----------------------------------
    tmc = tmc_ref[...]
    n_m = ml_ref.shape[0]
    _, logpm = _masked_logsoftmax(ml_ref[...].astype(jnp.float32), num_cluster)
    out_ref[2] = -jnp.sum(tmc * logpm) * (1.0 / n_m)

    # --- align_loss = CE(q_mix @ prototypes^T / T, tmc) ---------------------
    al = jax.lax.dot_general(
        qmix_ref[...], proto_ref[...],
        dimension_numbers=(((1,), (1,)), ((), ())),
        preferred_element_type=jnp.float32) * inv_t
    _, logpa = _masked_logsoftmax(al, num_cluster)
    out_ref[3] = -jnp.sum(tmc * logpa) * (1.0 / n_m)


# ---------------------------------------------------------------------------
# Kernel 4 (standalone, API parity with forward_reg_loss)
# ---------------------------------------------------------------------------
def _reg_loss_kernel(logits_ref, out_ref, *, num_cluster):
    n = logits_ref.shape[0]
    p, logp = _masked_logsoftmax(logits_ref[...].astype(jnp.float32), num_cluster)
    out_ref[0] = -jnp.sum(p * logp) * (1.0 / n)
    pm = jnp.mean(p, axis=0, keepdims=True)
    out_ref[1] = jnp.sum(pm * jnp.log(jnp.maximum(pm, 1e-12)))


# ---------------------------------------------------------------------------
# Wrapper module (JAX / Pallas)
# ---------------------------------------------------------------------------
class Wrapper:
    def __init__(self, in_dim, num_cluster, fea_dim=128, T=0.07,
                 mixup_alpha=1.0, num_samples=0, scale1=0.0, scale2=1.0,
                 key=None):
        if key is None:
            key = jax.random.PRNGKey(0)
        self.T = T
        self.num_cluster = num_cluster
        self.warmup = False
        self.in_dim = in_dim
        self.fea_dim = fea_dim
        self.mixup_alpha = mixup_alpha
        self.scale1 = scale1
        self.scale2 = scale2
        self.num_samples = num_samples

        # lane-dense padded widths (multiples of 128)
        self.cls_pad = _round_up(num_cluster)
        self.fea_pad = _round_up(fea_dim)

        ks = jax.random.split(key, 4)
        self.projector_q = self._init_head(ks[0], in_dim, fea_dim, self.fea_pad)
        self.classifier_q = self._init_head(ks[1], in_dim, num_cluster, self.cls_pad)

        proto = jax.random.normal(ks[2], (num_cluster, fea_dim), jnp.float32)
        proto = proto / jnp.linalg.norm(proto, axis=1, keepdims=True)
        self.prototypes = proto                              # reference layout
        self.prototypes_padded = jnp.zeros(
            (self.cls_pad, self.fea_pad), jnp.float32
        ).at[:num_cluster, :fea_dim].set(proto)

        self.confidences = jnp.zeros((num_samples,), jnp.float32)
        self.context_assignments = jnp.zeros((num_samples, num_cluster), jnp.float32)
        # pseudo_labels is used by forward_cls_loss but populated outside
        # __init__ in the reference; initialize deterministically here.
        self.pseudo_labels = jax.random.randint(ks[3], (num_samples,), 0, num_cluster)

    @staticmethod
    def _init_head(key, in_dim, out_dim, out_pad):
        k1, k2, k3, k4 = jax.random.split(key, 4)
        s = 1.0 / jnp.sqrt(jnp.float32(in_dim))
        # bf16 weights: half the HBM->VMEM DMA bytes, native MXU dtype.
        w1 = (jax.random.normal(k1, (in_dim, in_dim), jnp.float32) * s).astype(jnp.bfloat16)
        b1 = jax.random.normal(k2, (1, in_dim), jnp.float32) * 0.01
        g1 = jnp.ones((1, in_dim), jnp.float32)
        be1 = jnp.zeros((1, in_dim), jnp.float32)
        # second linear / BN padded to a lane-dense output width; padded
        # columns (zero W, zero b, gamma=1, beta=0) produce exactly 0.
        w2v = jax.random.normal(k3, (in_dim, out_dim), jnp.float32) * s
        w2 = jnp.zeros((in_dim, out_pad), jnp.float32).at[:, :out_dim].set(w2v)
        w2 = w2.astype(jnp.bfloat16)
        b2v = jax.random.normal(k4, (1, out_dim), jnp.float32) * 0.01
        b2 = jnp.zeros((1, out_pad), jnp.float32).at[:, :out_dim].set(b2v)
        g2 = jnp.ones((1, out_pad), jnp.float32)
        be2 = jnp.zeros((1, out_pad), jnp.float32)
        return (w1, b1, g1, be1, w2, b2, g2, be2)

    # --- heads (call once on CONCATENATED batches to amortize weight DMA) ---
    def project(self, feats):
        # L2 normalization fused into the kernel epilogue.
        return mlp_head(feats, self.projector_q, l2_normalize=True)

    def classify(self, feats):
        # Returns lane-dense padded logits [*, cls_pad]; columns >= num_cluster
        # are masked inside every loss kernel.
        return mlp_head(feats, self.classifier_q, l2_normalize=False)

    # --- losses -------------------------------------------------------------
    def forward_reg_loss(self, pred_logits):
        out = pl.pallas_call(
            functools.partial(_reg_loss_kernel, num_cluster=self.num_cluster),
            out_shape=jax.ShapeDtypeStruct((2,), jnp.float32),
            in_specs=[_VMEM],
            out_specs=_SMEM,
        )(pred_logits)
        return out[0], out[1]

    def forward_losses(self, q_w, w_logits, q_logits1, q_logits2, mix_logits,
                       q_mix, mix_randind, mix_lam, indices):
        """Fused reg + cls losses: exactly two pallas_calls."""
        labels = self.pseudo_labels[indices]
        conf = self.confidences[indices][:, None]
        targets_onehot = jax.nn.one_hot(labels, self.cls_pad, dtype=jnp.float32)
        n = q_logits1.shape[0]

        cls_loss1, tm = pl.pallas_call(
            functools.partial(_cls1_targets_kernel, num_cluster=self.num_cluster,
                              scale1=self.scale1, scale2=self.scale2),
            out_shape=(jax.ShapeDtypeStruct((1,), jnp.float32),
                       jax.ShapeDtypeStruct((n, self.cls_pad), jnp.float32)),
            in_specs=[_VMEM] * 4,
            out_specs=(_SMEM, _VMEM),
        )(q_logits1, q_logits2, targets_onehot, conf)

        # TODO(synk): the target repeat + permutation gather stays in plain JAX
        # (dynamic sublane gather); it is tiny and stop-gradient in the reference.
        rep = q_mix.shape[0] // n
        tmc = jnp.tile(tm, (rep, 1))
        tmc = (1.0 - mix_lam) * tmc[mix_randind] + mix_lam * tmc

        out = pl.pallas_call(
            functools.partial(_reg_mix_align_kernel, num_cluster=self.num_cluster,
                              inv_t=1.0 / self.T),
            out_shape=jax.ShapeDtypeStruct((4,), jnp.float32),
            in_specs=[_VMEM] * 5,
            out_specs=_SMEM,
        )(w_logits, mix_logits, q_mix, self.prototypes_padded, tmc)

        ent_loss, ne_loss, cls_loss2, align_loss = out[0], out[1], out[2], out[3]
        # warmup branch (hard-label F.cross_entropy) is never taken: __init__
        # sets warmup=False.  TODO(synk): warmup branch not implemented.
        return ent_loss, ne_loss, cls_loss1[0], cls_loss2, align_loss

    def forward_cls_loss(self, q_w, w_logits, q_logits1, q_logits2, mix_logits,
                         q_mix, mix_randind, mix_lam, indices):
        _, _, c1, c2, al = self.forward_losses(
            q_w, w_logits, q_logits1, q_logits2, mix_logits,
            q_mix, mix_randind, mix_lam, indices)
        return c1, c2, al

    def forward(self, im_w, im_q, im_k, indices):
        # Reference forward() delegates to forward_loss(), which is an empty
        # stub and returns None.
        return None


# ---------------------------------------------------------------------------
if __name__ == "__main__":
    key = jax.random.PRNGKey(0)
    k_img, k_enc, k_conf, k_perm, k_idx, k_model = jax.random.split(key, 6)

    N, C, H, W = 8, 3, 8, 8
    in_dim, fea_dim, num_cluster, num_samples = 128, 128, 10, 64

    model = Wrapper(in_dim=in_dim, num_cluster=num_cluster, fea_dim=fea_dim,
                    T=0.07, num_samples=num_samples, scale1=0.5, scale2=1.0,
                    key=k_model)
    # confidences buffer is zeros in __init__; populate deterministically so
    # the target-correction mixing path is actually exercised.
    model.confidences = jax.random.uniform(k_conf, (num_samples,), jnp.float32)

    im_w = jax.random.normal(jax.random.fold_in(k_img, 0), (N, C, H, W), jnp.float32)
    im_q = jax.random.normal(jax.random.fold_in(k_img, 1), (N, C, H, W), jnp.float32)
    im_k = jax.random.normal(jax.random.fold_in(k_img, 2), (N, C, H, W), jnp.float32)
    indices = jax.random.randint(k_idx, (N,), 0, num_samples)

    # encoder_q stand-in (encoder_type is external to the Wrapper): flatten + linear.
    w_enc = jax.random.normal(k_enc, (C * H * W, in_dim), jnp.float32) * 0.05
    encode = lambda im: im.reshape(im.shape[0], -1) @ w_enc

    f_w, f_q, f_k = encode(im_w), encode(im_q), encode(im_k)

    # mixup branch: 2x repeated queries mixed with a random permutation.
    rep = 2
    mix_lam = 0.65
    im_rep = jnp.tile(im_q, (rep, 1, 1, 1))
    mix_randind = jax.random.permutation(k_perm, rep * N)
    im_mix = (1.0 - mix_lam) * im_rep[mix_randind] + mix_lam * im_rep
    f_mix = encode(im_mix)

    # ---- batched head invocations (weights DMA'd once per head) -----------
    cls_in = jnp.concatenate([f_w, f_q, f_k, f_mix], axis=0)       # [5N, D]
    logits_all = model.classify(cls_in)                            # [5N, cls_pad]
    w_logits = logits_all[:N]
    q_logits1 = logits_all[N:2 * N]
    q_logits2 = logits_all[2 * N:3 * N]
    mix_logits = logits_all[3 * N:]

    proj_in = jnp.concatenate([f_w, f_mix], axis=0)                # [3N, D]
    q_all = model.project(proj_in)                                 # [3N, fea_pad]
    q_w = q_all[:N]
    q_mix = q_all[N:]

    # ---- fused losses (2 pallas_calls total) -------------------------------
    ent_loss, ne_loss, cls_loss1, cls_loss2, align_loss = model.forward_losses(
        q_w, w_logits, q_logits1, q_logits2, mix_logits,
        q_mix, mix_randind, mix_lam, indices)

    results = jax.block_until_ready(
        (ent_loss, ne_loss, cls_loss1, cls_loss2, align_loss))
    assert all(bool(jnp.isfinite(r)) for r in results)
    print("KERNEL_OK")
</pallas_src>

<mosaic_0001>
module attributes {stable_mosaic.version = 11 : i64} {
  func.func @_mlp_head_kernel(%arg0: memref<40x128xf32, #tpu.memory_space<vmem>>, %arg1: memref<128x128xbf16, #tpu.memory_space<vmem>>, %arg2: memref<1x128xf32, #tpu.memory_space<vmem>>, %arg3: memref<1x128xf32, #tpu.memory_space<vmem>>, %arg4: memref<1x128xf32, #tpu.memory_space<vmem>>, %arg5: memref<128x128xbf16, #tpu.memory_space<vmem>>, %arg6: memref<1x128xf32, #tpu.memory_space<vmem>>, %arg7: memref<1x128xf32, #tpu.memory_space<vmem>>, %arg8: memref<1x128xf32, #tpu.memory_space<vmem>>, %arg9: memref<40x128xf32, #tpu.memory_space<vmem>>) attributes {dimension_semantics = [], scalar_prefetch = 0 : i64, scratch_operands = 0 : i64, tpu.core_type = #tpu.core_type<tc>} {
    %c0 = arith.constant 0 : index
    %c0_0 = arith.constant 0 : index
    %0 = vector.load %arg0[%c0, %c0_0] : memref<40x128xf32, #tpu.memory_space<vmem>>, vector<40x128xf32>
    %1 = arith.truncf %0 : vector<40x128xf32> to vector<40x128xbf16>
    %c0_1 = arith.constant 0 : index
    %c0_2 = arith.constant 0 : index
    %2 = vector.load %arg1[%c0_1, %c0_2] : memref<128x128xbf16, #tpu.memory_space<vmem>>, vector<128x128xbf16>
    %cst = arith.constant dense<0.000000e+00> : vector<40x128xf32>
    %3 = tpu.matmul %1, %2, %cst {dimension_numbers = #tpu.dot_dimension_numbers<[1], [0], [0], [1], [0, 0, 1, 1], [], []>} : vector<40x128xbf16>, vector<128x128xbf16>, vector<40x128xf32> -> vector<40x128xf32>
    %c0_3 = arith.constant 0 : index
    %c0_4 = arith.constant 0 : index
    %4 = vector.load %arg2[%c0_3, %c0_4] : memref<1x128xf32, #tpu.memory_space<vmem>>, vector<1x128xf32>
    %5 = vector.broadcast %4 : vector<1x128xf32> to vector<40x128xf32>
    %6 = arith.addf %3, %5 : vector<40x128xf32>
    %cst_5 = arith.constant dense<0.000000e+00> : vector<128xf32>
    %7 = vector.multi_reduction <add>, %6, %cst_5 [0] : vector<40x128xf32> to vector<128xf32>
    %8 = vector.shape_cast %7 : vector<128xf32> to vector<1x128xf32>
    %cst_6 = arith.constant 2.500000e-02 : f32
    %9 = vector.broadcast %cst_6 : f32 to vector<1x128xf32>
    %10 = arith.mulf %8, %9 : vector<1x128xf32>
    %11 = arith.mulf %6, %6 : vector<40x128xf32>
    %cst_7 = arith.constant dense<0.000000e+00> : vector<128xf32>
    %12 = vector.multi_reduction <add>, %11, %cst_7 [0] : vector<40x128xf32> to vector<128xf32>
    %13 = vector.shape_cast %12 : vector<128xf32> to vector<1x128xf32>
    %cst_8 = arith.constant 2.500000e-02 : f32
    %14 = vector.broadcast %cst_8 : f32 to vector<1x128xf32>
    %15 = arith.mulf %13, %14 : vector<1x128xf32>
    %16 = arith.mulf %10, %10 : vector<1x128xf32>
    %17 = arith.subf %15, %16 : vector<1x128xf32>
    %cst_9 = arith.constant 0.000000e+00 : f32
    %18 = vector.broadcast %cst_9 : f32 to vector<1x128xf32>
    %19 = arith.maximumf %17, %18 : vector<1x128xf32>
    %c0_10 = arith.constant 0 : index
    %c0_11 = arith.constant 0 : index
    %20 = vector.load %arg3[%c0_10, %c0_11] : memref<1x128xf32, #tpu.memory_space<vmem>>, vector<1x128xf32>
    %cst_12 = arith.constant 9.99999974E-6 : f32
    %21 = vector.broadcast %cst_12 : f32 to vector<1x128xf32>
    %22 = arith.addf %19, %21 : vector<1x128xf32>
    %23 = math.rsqrt %22 : vector<1x128xf32>
    %24 = arith.mulf %20, %23 : vector<1x128xf32>
    %c0_13 = arith.constant 0 : index
    %c0_14 = arith.constant 0 : index
    %25 = vector.load %arg4[%c0_13, %c0_14] : memref<1x128xf32, #tpu.memory_space<vmem>>, vector<1x128xf32>
    %26 = arith.mulf %10, %24 : vector<1x128xf32>
    %27 = arith.subf %25, %26 : vector<1x128xf32>
    %28 = vector.broadcast %24 : vector<1x128xf32> to vector<40x128xf32>
    %29 = arith.mulf %6, %28 : vector<40x128xf32>
    %30 = vector.broadcast %27 : vector<1x128xf32> to vector<40x128xf32>
    %31 = arith.addf %29, %30 : vector<40x128xf32>
    %cst_15 = arith.constant 0.000000e+00 : f32
    %32 = vector.broadcast %cst_15 : f32 to vector<40x128xf32>
    %33 = arith.maximumf %31, %32 : vector<40x128xf32>
    %34 = arith.truncf %33 : vector<40x128xf32> to vector<40x128xbf16>
    %c0_16 = arith.constant 0 : index
    %c0_17 = arith.constant 0 : index
    %35 = vector.load %arg5[%c0_16, %c0_17] : memref<128x128xbf16, #tpu.memory_space<vmem>>, vector<128x128xbf16>
    %cst_18 = arith.constant dense<0.000000e+00> : vector<40x128xf32>
    %36 = tpu.matmul %34, %35, %cst_18 {dimension_numbers = #tpu.dot_dimension_numbers<[1], [0], [0], [1], [0, 0, 1, 1], [], []>} : vector<40x128xbf16>, vector<128x128xbf16>, vector<40x128xf32> -> vector<40x128xf32>
    %c0_19 = arith.constant 0 : index
    %c0_20 = arith.constant 0 : index
    %37 = vector.load %arg6[%c0_19, %c0_20] : memref<1x128xf32, #tpu.memory_space<vmem>>, vector<1x128xf32>
    %38 = vector.broadcast %37 : vector<1x128xf32> to vector<40x128xf32>
    %39 = arith.addf %36, %38 : vector<40x128xf32>
    %cst_21 = arith.constant dense<0.000000e+00> : vector<128xf32>
    %40 = vector.multi_reduction <add>, %39, %cst_21 [0] : vector<40x128xf32> to vector<128xf32>
    %41 = vector.shape_cast %40 : vector<128xf32> to vector<1x128xf32>
    %cst_22 = arith.constant 2.500000e-02 : f32
    %42 = vector.broadcast %cst_22 : f32 to vector<1x128xf32>
    %43 = arith.mulf %41, %42 : vector<1x128xf32>
    %44 = arith.mulf %39, %39 : vector<40x128xf32>
    %cst_23 = arith.constant dense<0.000000e+00> : vector<128xf32>
    %45 = vector.multi_reduction <add>, %44, %cst_23 [0] : vector<40x128xf32> to vector<128xf32>
    %46 = vector.shape_cast %45 : vector<128xf32> to vector<1x128xf32>
    %cst_24 = arith.constant 2.500000e-02 : f32
    %47 = vector.broadcast %cst_24 : f32 to vector<1x128xf32>
    %48 = arith.mulf %46, %47 : vector<1x128xf32>
    %49 = arith.mulf %43, %43 : vector<1x128xf32>
    %50 = arith.subf %48, %49 : vector<1x128xf32>
    %cst_25 = arith.constant 0.000000e+00 : f32
    %51 = vector.broadcast %cst_25 : f32 to vector<1x128xf32>
    %52 = arith.maximumf %50, %51 : vector<1x128xf32>
    %c0_26 = arith.constant 0 : index
    %c0_27 = arith.constant 0 : index
    %53 = vector.load %arg7[%c0_26, %c0_27] : memref<1x128xf32, #tpu.memory_space<vmem>>, vector<1x128xf32>
    %cst_28 = arith.constant 9.99999974E-6 : f32
    %54 = vector.broadcast %cst_28 : f32 to vector<1x128xf32>
    %55 = arith.addf %52, %54 : vector<1x128xf32>
    %56 = math.rsqrt %55 : vector<1x128xf32>
    %57 = arith.mulf %53, %56 : vector<1x128xf32>
    %c0_29 = arith.constant 0 : index
    %c0_30 = arith.constant 0 : index
    %58 = vector.load %arg8[%c0_29, %c0_30] : memref<1x128xf32, #tpu.memory_space<vmem>>, vector<1x128xf32>
    %59 = arith.mulf %43, %57 : vector<1x128xf32>
    %60 = arith.subf %58, %59 : vector<1x128xf32>
    %61 = vector.broadcast %57 : vector<1x128xf32> to vector<40x128xf32>
    %62 = arith.mulf %39, %61 : vector<40x128xf32>
    %63 = vector.broadcast %60 : vector<1x128xf32> to vector<40x128xf32>
    %64 = arith.addf %62, %63 : vector<40x128xf32>
    %c0_31 = arith.constant 0 : index
    %c0_32 = arith.constant 0 : index
    %65 = vector.load %arg9[%c0_31, %c0_32] : memref<40x128xf32, #tpu.memory_space<vmem>>, vector<40x128xf32>
    tpu.vector_store %arg9[%c0_31, %c0_32], %64 {strides = array<i32>} : memref<40x128xf32, #tpu.memory_space<vmem>>, vector<40x128xf32>,
    return
  }
}

</mosaic_0001>

<llo_original>
// kernel: tpu_custom_call.1
$region0: #{tpu_custom_call.1}
  #allocation0 [shape = 'u32[]', space=smem, size = 0x4, offset = 0x4, fixed_abs, tag = 'smem constant byte address 0x4 - core index']
  #allocation1 [shape = 'u32[144,128]{1,0:T(1,128)}', space=vmem, size = 0x12000, scoped, tag = 'internal scratch']
  %s0 = inlined_call_operand.hbm [shape: f32[40,128], index: 0, kind: input, shape index: {}]
  %s1 = inlined_call_operand.hbm [shape: bf16[128,128], index: 1, kind: input, shape index: {}]
  %s2 = inlined_call_operand.vmem [shape: f32[1,128], index: 2, kind: input, shape index: {}]
  %s3 = inlined_call_operand.vmem [shape: f32[1,128], index: 3, kind: input, shape index: {}]
  %s4 = inlined_call_operand.vmem [shape: f32[1,128], index: 4, kind: input, shape index: {}]
  %s5 = inlined_call_operand.hbm [shape: bf16[128,128], index: 5, kind: input, shape index: {}]
  %s6 = inlined_call_operand.vmem [shape: f32[1,128], index: 6, kind: input, shape index: {}]
  %s7 = inlined_call_operand.vmem [shape: f32[1,128], index: 7, kind: input, shape index: {}]
  %s8 = inlined_call_operand.vmem [shape: f32[1,128], index: 8, kind: input, shape index: {}]
  %s9 = inlined_call_operand.hbm [shape: f32[40,128], index: 9, kind: output, shape index: {}]
  %s10 = sld [smem:[#allocation0]]
  $region58: #{tpu_custom_call.1} parent=0
    _
  %s12 = ssub.s32 1, %s10
  %s13 = scalar_select 0, %s12, %s10
  $region1: #{tpu_custom_call.1} parent=0
    #allocation2 [shape = 'u8[20480]{0}', space=vmem, size = 0x5000, scoped, tag = 'input window, operand 0, single buffered']
    #allocation3 [shape = 's32[1]{0}', space=sflag, size = 0x4, scoped, tag = 'scoped memory for tpu_custom_call.1']
    #allocation4 [shape = 's32[1]{0}', space=sflag, size = 0x4, scoped, tag = 'scoped memory for tpu_custom_call.1']
    #allocation5 [shape = 'u8[32768]{0}', space=vmem, size = 0x8000, scoped, tag = 'input window, operand 1, single buffered']
    #allocation6 [shape = 's32[1]{0}', space=sflag, size = 0x4, scoped, tag = 'scoped memory for tpu_custom_call.1']
    #allocation7 [shape = 'u8[32768]{0}', space=vmem, size = 0x8000, scoped, tag = 'input window, operand 5, single buffered']
    #allocation8 [shape = 'u8[20480]{0}', space=vmem, size = 0x5000, scoped, tag = 'output window, operand 0, single buffered']
    %14 = vsyncpa [#allocation3], 0
    %15 = vsyncpa [#allocation6], 0
    %16 = vsyncpa [#allocation4], 0
    // Predicated region
    $region2: #{tpu_custom_call.1} parent=1 // pred_check
      _
    $region3: #{tpu_custom_call.1} parent=1 // pred_check_branch
      %18 = sbr.rel (0) target = $region5
    $region4: #{tpu_custom_call.1} parent=1 // pred_region
      %s20 = ssub.s32 640, 640
      %21 = vsyncadd [#allocation3], %s20
      %s22 = sshll.u32 [#allocation2], 4
      %s23 = int_to_ptr.vmem [resolvable:$true] %s22
      %28 = dma.hbm_to_vmem [thread:$0]  %s0, 640, %s23, [#allocation3], 128, 128, 8
    $region5: #{tpu_custom_call.1} parent=1 // pred_fallthru
      _
    // Predicated region
    $region6: #{tpu_custom_call.1} parent=1 // pred_check
      _
    $region7: #{tpu_custom_call.1} parent=1 // pred_check_branch
      %30 = sbr.rel (0) target = $region9
    $region8: #{tpu_custom_call.1} parent=1 // pred_region
      %s32 = ssub.s32 1024, 1024
      %33 = vsyncadd [#allocation6], %s32
      %s34 = sshll.u32 [#allocation5], 4
      %s35 = int_to_ptr.vmem [resolvable:$true] %s34
      %40 = dma.hbm_to_vmem [thread:$0]  %s1, 1024, %s35, [#allocation6], 64, 64, 4
    $region9: #{tpu_custom_call.1} parent=1 // pred_fallthru
      _
    // Predicated region
    $region10: #{tpu_custom_call.1} parent=1 // pred_check
      _
    $region11: #{tpu_custom_call.1} parent=1 // pred_check_branch
      %42 = sbr.rel (0) target = $region13
    $region12: #{tpu_custom_call.1} parent=1 // pred_region
      _
    $region13: #{tpu_custom_call.1} parent=1 // pred_fallthru
      _
    // Predicated region
    $region14: #{tpu_custom_call.1} parent=1 // pred_check
      _
    $region15: #{tpu_custom_call.1} parent=1 // pred_check_branch
      %44 = sbr.rel (0) target = $region17
    $region16: #{tpu_custom_call.1} parent=1 // pred_region
      _
    $region17: #{tpu_custom_call.1} parent=1 // pred_fallthru
      _
    // Predicated region
    $region18: #{tpu_custom_call.1} parent=1 // pred_check
      _
    $region19: #{tpu_custom_call.1} parent=1 // pred_check_branch
      %46 = sbr.rel (0) target = $region21
    $region20: #{tpu_custom_call.1} parent=1 // pred_region
      _
    $region21: #{tpu_custom_call.1} parent=1 // pred_fallthru
      _
    // Predicated region
    $region22: #{tpu_custom_call.1} parent=1 // pred_check
      _
    $region23: #{tpu_custom_call.1} parent=1 // pred_check_branch
      %48 = sbr.rel (0) target = $region25
    $region24: #{tpu_custom_call.1} parent=1 // pred_region
      %s50 = ssub.s32 1024, 1024
      %51 = vsyncadd [#allocation6], %s50
      %s52 = sshll.u32 [#allocation7], 4
      %s53 = int_to_ptr.vmem [resolvable:$true] %s52
      %58 = dma.hbm_to_vmem [thread:$0]  %s5, 1024, %s53, [#allocation6], 64, 64, 4
    $region25: #{tpu_custom_call.1} parent=1 // pred_fallthru
      _
    // Predicated region
    $region26: #{tpu_custom_call.1} parent=1 // pred_check
      _
    $region27: #{tpu_custom_call.1} parent=1 // pred_check_branch
      %60 = sbr.rel (0) target = $region29
    $region28: #{tpu_custom_call.1} parent=1 // pred_region
      _
    $region29: #{tpu_custom_call.1} parent=1 // pred_fallthru
      _
    // Predicated region
    $region30: #{tpu_custom_call.1} parent=1 // pred_check
      _
    $region31: #{tpu_custom_call.1} parent=1 // pred_check_branch
      %62 = sbr.rel (0) target = $region33
    $region32: #{tpu_custom_call.1} parent=1 // pred_region
      _
    $region33: #{tpu_custom_call.1} parent=1 // pred_fallthru
      _
    // Predicated region
    $region34: #{tpu_custom_call.1} parent=1 // pred_check
      _
    $region35: #{tpu_custom_call.1} parent=1 // pred_check_branch
      %64 = sbr.rel (0) target = $region37
    $region36: #{tpu_custom_call.1} parent=1 // pred_region
      _
    $region37: #{tpu_custom_call.1} parent=1 // pred_fallthru
      _
    // Predicated region
    $region38: #{tpu_custom_call.1} parent=1 // pred_check
      _
    $region39: #{tpu_custom_call.1} parent=1 // pred_check_branch
      %66 = sbr.rel (0) target = $region41
    $region40: #{tpu_custom_call.1} parent=1 // pred_region
      %67 = dma.done [#allocation3], 640
    $region41: #{tpu_custom_call.1} parent=1 // pred_fallthru
      _
    // Predicated region
    $region42: #{tpu_custom_call.1} parent=1 // pred_check
      _
    $region43: #{tpu_custom_call.1} parent=1 // pred_check_branch
      %69 = sbr.rel (0) target = $region45
    $region44: #{tpu_custom_call.1} parent=1 // pred_region
      %70 = dma.done [#allocation6], 1024
    $region45: #{tpu_custom_call.1} parent=1 // pred_fallthru
      _
    // Predicated region
    $region46: #{tpu_custom_call.1} parent=1 // pred_check
      _
    $region47: #{tpu_custom_call.1} parent=1 // pred_check_branch
      %72 = sbr.rel (0) target = $region49
    $region48: #{tpu_custom_call.1} parent=1 // pred_region
      %73 = dma.done [#allocation6], 1024
    $region49: #{tpu_custom_call.1} parent=1 // pred_fallthru
      _
    %v75 = vld [vmem:[#allocation2] sm:$0xff]
    %v76 = vld [vmem:[#allocation2 + $0x8] sm:$0xff]
    %v77 = vld [vmem:[#allocation2 + $0x10] sm:$0xff]
    %v78 = vld [vmem:[#allocation2 + $0x18] sm:$0xff]
    %v79 = vld [vmem:[#allocation2 + $0x20] sm:$0xff]
    %v80 = vpack.c.bf16 %v76, %v75
    %v81 = vpack.c.bf16 %v78, %v77
    %v82 = vpack.c.bf16 %v79, %v79
    %v83 = vld [vmem:[#allocation5] sm:$0xf]
    %v84 = vld [vmem:[#allocation5 + $0x4] sm:$0xf]
    %v85 = vld [vmem:[#allocation5 + $0x8] sm:$0xf]
    %v86 = vld [vmem:[#allocation5 + $0xc] sm:$0xf]
    %v87 = vld [vmem:[#allocation5 + $0x10] sm:$0xf]
    %v88 = vld [vmem:[#allocation5 + $0x14] sm:$0xf]
    %v89 = vld [vmem:[#allocation5 + $0x18] sm:$0xf]
    %v90 = vld [vmem:[#allocation5 + $0x1c] sm:$0xf]
    %v91 = vld [vmem:[#allocation5 + $0x20] sm:$0xf]
    %v92 = vld [vmem:[#allocation5 + $0x24] sm:$0xf]
    %v93 = vld [vmem:[#allocation5 + $0x28] sm:$0xf]
    %v94 = vld [vmem:[#allocation5 + $0x2c] sm:$0xf]
    %v95 = vld [vmem:[#allocation5 + $0x30] sm:$0xf]
    %v96 = vld [vmem:[#allocation5 + $0x34] sm:$0xf]
    %v97 = vld [vmem:[#allocation5 + $0x38] sm:$0xf]
    %v98 = vld [vmem:[#allocation5 + $0x3c] sm:$0xf]
    %v99 = vld [vmem:[%s2] sm:$0x1]
    %v101 = vlaneseq
    %v102 = vshrl.u32 %v101, 7
    %v103 = vsub.s32 0, %v102
    %v104 = vrot.slane %v99, %v103
    %v122 = vunpack.c.l.b16 %v83
    %v123 = vunpack.c.l.b16 %v84
    %v124 = vunpack.c.l.b16 %v85
    %v125 = vunpack.c.l.b16 %v86
    %v126 = vunpack.c.l.b16 %v87
    %v127 = vunpack.c.l.b16 %v88
    %v128 = vunpack.c.l.b16 %v89
    %v129 = vunpack.c.l.b16 %v90
    %v130 = vunpack.c.l.b16 %v91
    %v131 = vunpack.c.l.b16 %v92
    %v132 = vunpack.c.l.b16 %v93
    %v133 = vunpack.c.l.b16 %v94
    %v134 = vunpack.c.l.b16 %v95
    %v135 = vunpack.c.l.b16 %v96
    %v136 = vunpack.c.l.b16 %v97
    %v137 = vunpack.c.l.b16 %v98
    %v138 = vpack.c.b16 %v123, %v122
    %v139 = vpack.c.b16 %v125, %v124
    %v140 = vpack.c.b16 %v127, %v126
    %v141 = vpack.c.b16 %v129, %v128
    %v142 = vpack.c.b16 %v131, %v130
    %v143 = vpack.c.b16 %v133, %v132
    %v144 = vpack.c.b16 %v135, %v134
    %v145 = vpack.c.b16 %v137, %v136
    %154 = vmatprep.subr.bf16.mxu0 0
    %155 = vmatpush1.bf16.msra.mxu0 %v145
    %156 = vmatprep.subr.bf16.mxu0 0
    %157 = vmatpush1.bf16.msra.mxu0 %v144
    %158 = vmatprep.subr.bf16.mxu0 0
    %159 = vmatpush1.bf16.msra.mxu0 %v143
    %160 = vmatprep.subr.bf16.mxu0 0
    %161 = vmatpush1.bf16.msra.mxu0 %v142
    %162 = vmatprep.subr.bf16.mxu0 0
    %163 = vmatpush1.bf16.msra.mxu0 %v141
    %164 = vmatprep.subr.bf16.mxu0 0
    %165 = vmatpush1.bf16.msra.mxu0 %v140
    %166 = vmatprep.subr.bf16.mxu0 0
    %167 = vmatpush1.bf16.msra.mxu0 %v139
    %168 = vmatprep.subr.bf16.mxu0 0
    %169 = vmatpush1.bf16.msra.mxu0 %v138
    %170 = vmatprep.subr.bf16.mxu0 0
    %171 = vmatpush2.bf16.msra.mxu0 0
    %172 = vmatprep.subr.bf16.mxu0 0
    %173 = vmatpush2.bf16.msra.mxu0 0
    %174 = vmatprep.subr.bf16.mxu0 0
    %175 = vmatpush2.bf16.msra.mxu0 0
    %176 = vmatprep.subr.bf16.mxu0 0
    %177 = vmatpush2.bf16.msra.mxu0 0
    %178 = vmatprep.subr.bf16.mxu0 0
    %179 = vmatpush2.bf16.msra.mxu0 0
    %180 = vmatprep.subr.bf16.mxu0 0
    %181 = vmatpush2.bf16.msra.mxu0 0
    %182 = vmatprep.subr.bf16.mxu0 0
    %183 = vmatpush2.bf16.msra.mxu0 0
    %184 = vmatprep.subr.bf16.mxu0 0
    %185 = vmatpush2.bf16.msra.mxu0 0
    %186 = vmatprep.mubr.bf16.mxu0 0
    %187 = vmatmul.mubr.bf16.gmra.mxu0 %v80
    %v188 = vpop.f32.mrf.mxu0
    %v189 = vadd.f32 %v104, %v188
    %v190 = vpop.f32.mrf.mxu0
    %v191 = vpop.f32.mrf.mxu0
    %v192 = vadd.f32 %v104, %v191
    %v193 = vpop.f32.mrf.mxu0
    %194 = vmatprep.mubr.bf16.mxu0 0
    %195 = vmatmul.mubr.bf16.gmra.mxu0 %v81
    %v196 = vpop.f32.mrf.mxu0
    %v197 = vadd.f32 %v104, %v196
    %v198 = vpop.f32.mrf.mxu0
    %v199 = vpop.f32.mrf.mxu0
    %v200 = vadd.f32 %v104, %v199
    %v201 = vpop.f32.mrf.mxu0
    %202 = vmatprep.mubr.bf16.mxu0 0
    %203 = vmatmul.mubr.bf16.gmra.mxu0 %v82
    %v204 = vpop.f32.mrf.mxu0
    %v205 = vadd.f32 %v104, %v204
    %v206 = vpop.f32.mrf.mxu0
    %v207 = vpop.f32.mrf.mxu0
    %v208 = vpop.f32.mrf.mxu0
    %209 = vdwg.mxu0
    %v210 = vadd.f32 %v189, %v192
    %v211 = vadd.f32 %v210, %v197
    %v212 = vadd.f32 %v211, %v200
    %v213 = vadd.f32 %v212, %v205
    %v214 = vrot.slane %v213, 4
    %v215 = vadd.f32 %v213, %v214
    %v216 = vrot.slane %v215, 2
    %v217 = vadd.f32 %v215, %v216
    %v218 = vrot.slane %v217, 1
    %v219 = vadd.f32 %v217, %v218
    %v220 = vmul.f32 %v219, 0.025
    %v221 = vmul.f32 %v189, %v189
    %v222 = vmul.f32 %v192, %v192
    %v223 = vmul.f32 %v197, %v197
    %v224 = vmul.f32 %v200, %v200
    %v225 = vmul.f32 %v205, %v205
    %v226 = vadd.f32 %v221, %v222
    %v227 = vadd.f32 %v226, %v223
    %v228 = vadd.f32 %v227, %v224
    %v229 = vadd.f32 %v228, %v225
    %v230 = vrot.slane %v229, 4
    %v231 = vadd.f32 %v229, %v230
    %v232 = vrot.slane %v231, 2
    %v233 = vadd.f32 %v231, %v232
    %v234 = vrot.slane %v233, 1
    %v235 = vadd.f32 %v233, %v234
    %v236 = vmul.f32 %v235, 0.025
    %v237 = vmul.f32 %v220, %v220
    %v238 = vsub.f32 %v236, %v237
    %v239 = vmax.f32 %v238, 0.0
    %v240 = vld [vmem:[%s3] sm:$0x1]
    %v241 = vadd.f32 %v239, 1e-05
    %v242 = vrsqrt.pop %v241
    %v243 = vmul.f32 %v240, %v242
    %v244 = vld [vmem:[%s4] sm:$0x1]
    %v245 = vmul.f32 %v220, %v243
    %v246 = vsub.f32 %v244, %v245
    %v248 = vlaneseq
    %v249 = vshrl.u32 %v248, 7
    %v250 = vsub.s32 0, %v249
    %v251 = vrot.slane %v243, %v250
    %v253 = vmul.f32 %v189, %v251
    %v254 = vmul.f32 %v192, %v251
    %v255 = vmul.f32 %v197, %v251
    %v256 = vmul.f32 %v200, %v251
    %v257 = vmul.f32 %v205, %v251
    %v259 = vlaneseq
    %v260 = vshrl.u32 %v259, 7
    %v261 = vsub.s32 0, %v260
    %v262 = vrot.slane %v246, %v261
    %v264 = vadd.f32 %v253, %v262
    %v265 = vadd.f32 %v254, %v262
    %v266 = vadd.f32 %v255, %v262
    %v267 = vadd.f32 %v256, %v262
    %v268 = vadd.f32 %v257, %v262
    %v269 = vmax.f32 %v264, 0.0
    %v270 = vmax.f32 %v265, 0.0
    %v271 = vmax.f32 %v266, 0.0
    %v272 = vmax.f32 %v267, 0.0
    %v273 = vmax.f32 %v268, 0.0
    %v274 = vpack.c.bf16 %v270, %v269
    %v275 = vpack.c.bf16 %v272, %v271
    %v276 = vpack.c.bf16 %v273, %v273
    %v277 = vld [vmem:[#allocation7] sm:$0xf]
    %v278 = vld [vmem:[#allocation7 + $0x4] sm:$0xf]
    %v279 = vld [vmem:[#allocation7 + $0x8] sm:$0xf]
    %v280 = vld [vmem:[#allocation7 + $0xc] sm:$0xf]
    %v281 = vld [vmem:[#allocation7 + $0x10] sm:$0xf]
    %v282 = vld [vmem:[#allocation7 + $0x14] sm:$0xf]
    %v283 = vld [vmem:[#allocation7 + $0x18] sm:$0xf]
    %v284 = vld [vmem:[#allocation7 + $0x1c] sm:$0xf]
    %v285 = vld [vmem:[#allocation7 + $0x20] sm:$0xf]
    %v286 = vld [vmem:[#allocation7 + $0x24] sm:$0xf]
    %v287 = vld [vmem:[#allocation7 + $0x28] sm:$0xf]
    %v288 = vld [vmem:[#allocation7 + $0x2c] sm:$0xf]
    %v289 = vld [vmem:[#allocation7 + $0x30] sm:$0xf]
    %v290 = vld [vmem:[#allocation7 + $0x34] sm:$0xf]
    %v291 = vld [vmem:[#allocation7 + $0x38] sm:$0xf]
    %v292 = vld [vmem:[#allocation7 + $0x3c] sm:$0xf]
    %v293 = vld [vmem:[%s6] sm:$0x1]
    %v295 = vlaneseq
    %v296 = vshrl.u32 %v295, 7
    %v297 = vsub.s32 0, %v296
    %v298 = vrot.slane %v293, %v297
    %v316 = vunpack.c.l.b16 %v277
    %v317 = vunpack.c.l.b16 %v278
    %v318 = vunpack.c.l.b16 %v279
    %v319 = vunpack.c.l.b16 %v280
    %v320 = vunpack.c.l.b16 %v281
    %v321 = vunpack.c.l.b16 %v282
    %v322 = vunpack.c.l.b16 %v283
    %v323 = vunpack.c.l.b16 %v284
    %v324 = vunpack.c.l.b16 %v285
    %v325 = vunpack.c.l.b16 %v286
    %v326 = vunpack.c.l.b16 %v287
    %v327 = vunpack.c.l.b16 %v288
    %v328 = vunpack.c.l.b16 %v289
    %v329 = vunpack.c.l.b16 %v290
    %v330 = vunpack.c.l.b16 %v291
    %v331 = vunpack.c.l.b16 %v292
    %v332 = vpack.c.b16 %v317, %v316
    %v333 = vpack.c.b16 %v319, %v318
    %v334 = vpack.c.b16 %v321, %v320
    %v335 = vpack.c.b16 %v323, %v322
    %v336 = vpack.c.b16 %v325, %v324
    %v337 = vpack.c.b16 %v327, %v326
    %v338 = vpack.c.b16 %v329, %v328
    %v339 = vpack.c.b16 %v331, %v330
    %348 = vmatprep.subr.bf16.mxu0 0
    %349 = vmatpush1.bf16.msra.mxu0 %v339
    %350 = vmatprep.subr.bf16.mxu0 0
    %351 = vmatpush1.bf16.msra.mxu0 %v338
    %352 = vmatprep.subr.bf16.mxu0 0
    %353 = vmatpush1.bf16.msra.mxu0 %v337
    %354 = vmatprep.subr.bf16.mxu0 0
    %355 = vmatpush1.bf16.msra.mxu0 %v336
    %356 = vmatprep.subr.bf16.mxu0 0
    %357 = vmatpush1.bf16.msra.mxu0 %v335
    %358 = vmatprep.subr.bf16.mxu0 0
    %359 = vmatpush1.bf16.msra.mxu0 %v334
    %360 = vmatprep.subr.bf16.mxu0 0
    %361 = vmatpush1.bf16.msra.mxu0 %v333
    %362 = vmatprep.subr.bf16.mxu0 0
    %363 = vmatpush1.bf16.msra.mxu0 %v332
    %364 = vmatprep.subr.bf16.mxu0 0
    %365 = vmatpush2.bf16.msra.mxu0 0
    %366 = vmatprep.subr.bf16.mxu0 0
    %367 = vmatpush2.bf16.msra.mxu0 0
    %368 = vmatprep.subr.bf16.mxu0 0
    %369 = vmatpush2.bf16.msra.mxu0 0
    %370 = vmatprep.subr.bf16.mxu0 0
    %371 = vmatpush2.bf16.msra.mxu0 0
    %372 = vmatprep.subr.bf16.mxu0 0
    %373 = vmatpush2.bf16.msra.mxu0 0
    %374 = vmatprep.subr.bf16.mxu0 0
    %375 = vmatpush2.bf16.msra.mxu0 0
    %376 = vmatprep.subr.bf16.mxu0 0
    %377 = vmatpush2.bf16.msra.mxu0 0
    %378 = vmatprep.subr.bf16.mxu0 0
    %379 = vmatpush2.bf16.msra.mxu0 0
    %380 = vmatprep.mubr.bf16.mxu0 0
    %381 = vmatmul.mubr.bf16.gmra.mxu0 %v274
    %v382 = vpop.f32.mrf.mxu0
    %v383 = vadd.f32 %v298, %v382
    %v384 = vpop.f32.mrf.mxu0
    %v385 = vpop.f32.mrf.mxu0
    %v386 = vadd.f32 %v298, %v385
    %v387 = vpop.f32.mrf.mxu0
    %388 = vmatprep.mubr.bf16.mxu0 0
    %389 = vmatmul.mubr.bf16.gmra.mxu0 %v275
    %v390 = vpop.f32.mrf.mxu0
    %v391 = vadd.f32 %v298, %v390
    %v392 = vpop.f32.mrf.mxu0
    %v393 = vpop.f32.mrf.mxu0
    %v394 = vadd.f32 %v298, %v393
    %v395 = vpop.f32.mrf.mxu0
    %396 = vmatprep.mubr.bf16.mxu0 0
    %397 = vmatmul.mubr.bf16.gmra.mxu0 %v276
    %v398 = vpop.f32.mrf.mxu0
    %v399 = vadd.f32 %v298, %v398
    %v400 = vpop.f32.mrf.mxu0
    %v401 = vpop.f32.mrf.mxu0
    %v402 = vpop.f32.mrf.mxu0
    %403 = vdwg.mxu0
    %v404 = vadd.f32 %v383, %v386
    %v405 = vadd.f32 %v404, %v391
    %v406 = vadd.f32 %v405, %v394
    %v407 = vadd.f32 %v406, %v399
    %v408 = vrot.slane %v407, 4
    %v409 = vadd.f32 %v407, %v408
    %v410 = vrot.slane %v409, 2
    %v411 = vadd.f32 %v409, %v410
    %v412 = vrot.slane %v411, 1
    %v413 = vadd.f32 %v411, %v412
    %v414 = vmul.f32 %v413, 0.025
    %v415 = vmul.f32 %v383, %v383
    %v416 = vmul.f32 %v386, %v386
    %v417 = vmul.f32 %v391, %v391
    %v418 = vmul.f32 %v394, %v394
    %v419 = vmul.f32 %v399, %v399
    %v420 = vadd.f32 %v415, %v416
    %v421 = vadd.f32 %v420, %v417
    %v422 = vadd.f32 %v421, %v418
    %v423 = vadd.f32 %v422, %v419
    %v424 = vrot.slane %v423, 4
    %v425 = vadd.f32 %v423, %v424
    %v426 = vrot.slane %v425, 2
    %v427 = vadd.f32 %v425, %v426
    %v428 = vrot.slane %v427, 1
    %v429 = vadd.f32 %v427, %v428
    %v430 = vmul.f32 %v429, 0.025
    %v431 = vmul.f32 %v414, %v414
    %v432 = vsub.f32 %v430, %v431
    %v433 = vmax.f32 %v432, 0.0
    %v434 = vld [vmem:[%s7] sm:$0x1]
    %v435 = vadd.f32 %v433, 1e-05
    %v436 = vrsqrt.pop %v435
    %v437 = vmul.f32 %v434, %v436
    %v438 = vld [vmem:[%s8] sm:$0x1]
    %v439 = vmul.f32 %v414, %v437
    %v440 = vsub.f32 %v438, %v439
    %v442 = vlaneseq
    %v443 = vshrl.u32 %v442, 7
    %v444 = vsub.s32 0, %v443
    %v445 = vrot.slane %v437, %v444
    %v447 = vmul.f32 %v383, %v445
    %v448 = vmul.f32 %v386, %v445
    %v449 = vmul.f32 %v391, %v445
    %v450 = vmul.f32 %v394, %v445
    %v451 = vmul.f32 %v399, %v445
    %v453 = vlaneseq
    %v454 = vshrl.u32 %v453, 7
    %v455 = vsub.s32 0, %v454
    %v456 = vrot.slane %v440, %v455
    %v458 = vadd.f32 %v447, %v456
    %v459 = vadd.f32 %v448, %v456
    %v460 = vadd.f32 %v449, %v456
    %v461 = vadd.f32 %v450, %v456
    %v462 = vadd.f32 %v451, %v456
    %463 = vst [vmem:[#allocation8] sm:$0xff] %v458
    %464 = vst [vmem:[#allocation8 + $0x8] sm:$0xff] %v459
    %465 = vst [vmem:[#allocation8 + $0x10] sm:$0xff] %v460
    %466 = vst [vmem:[#allocation8 + $0x18] sm:$0xff] %v461
    %467 = vst [vmem:[#allocation8 + $0x20] sm:$0xff] %v462
    // Predicated region
    $region50: #{tpu_custom_call.1} parent=1 // pred_check
      _
    $region51: #{tpu_custom_call.1} parent=1 // pred_check_branch
      %469 = sbr.rel (0) target = $region53
    $region52: #{tpu_custom_call.1} parent=1 // pred_region
      %s471 = ssub.s32 640, 640
      %472 = vsyncadd [#allocation4], %s471
      %s473 = sshll.u32 [#allocation8], 4
      %s474 = int_to_ptr.vmem [resolvable:$true] %s473
      %479 = dma.vmem_to_hbm [thread:$0]  %s474, 640, %s9, [#allocation4], 128, 128, 8
    $region53: #{tpu_custom_call.1} parent=1 // pred_fallthru
      _
    // Predicated region
    $region54: #{tpu_custom_call.1} parent=1 // pred_check
      _
    $region55: #{tpu_custom_call.1} parent=1 // pred_check_branch
      %481 = sbr.rel (0) target = $region57
    $region56: #{tpu_custom_call.1} parent=1 // pred_region
      %482 = dma.done [#allocation4], 640
    $region57: #{tpu_custom_call.1} parent=1 // pred_fallthru
      _
    %483 = vsyncpa [#allocation3], 1
    %484 = vsyncpa [#allocation6], 1
    %485 = vsyncpa [#allocation4], 1

</llo_original>
